<compile_context>
chip_gen: v6e
topology: v6e:2x2x1
jax: 0.10.0
libtpu: 0.0.40
codegen_flags: <defaults>
</compile_context>

<pallas_src>
import functools

import jax
import jax.numpy as jnp
from jax import lax
from jax.experimental import pallas as pl
from jax.experimental.pallas import tpu as pltpu


def _vmem_limit_bytes() -> int:
    """Generation-aware VMEM budget (96 MiB-class on v5e/v6e, ~48 MiB on v7x)."""
    try:
        cap = int(pltpu.get_tpu_info().vmem_capacity_bytes)
    except Exception:
        cap = 64 * 1024 * 1024  # conservative default (v7x per-core)
    return max(32 * 1024 * 1024, min(100 * 1024 * 1024, (cap * 3) // 4))


def _pick_tile(n: int, d: int, vmem_limit: int) -> int:
    """Largest lane-aligned feature tile whose stage-2 working set fits VMEM."""
    budget = int(vmem_limit * 0.6)  # headroom for pipeline buffers / relayouts
    candidates = [t for t in (1024, 512, 256, 128) if d % t == 0]
    if not candidates:
        return d  # small / odd D: one full-width tile, no padding needed
    for t in candidates:
        # Per grid step: a,b bf16 double-buffered + f32 widened copies + c, c^2.
        need = 2 * 2 * (n * t * 2) + 2 * (n * t * 4) + 2 * (t * t * 4)
        if need <= budget:
            return t
    return candidates[-1]


def _normalize_kernel(za_ref, zb_ref, an_ref, bn_ref):
    """Per-column mean / 1/std (ddof=1) for one feature tile of both views,
    emitting pre-normalized bf16 blocks.  1/N of c = a^T b / N is folded into A."""
    za = za_ref[...].astype(jnp.float32)
    zb = zb_ref[...].astype(jnp.float32)
    n = za.shape[0]
    inv_n = jnp.float32(1.0 / n)
    # TODO(synk): n == 1 or a zero-variance column yields inf/NaN, matching
    # torch.std(unbiased=True) semantics; no extra guard added.
    inv_nm1 = jnp.float32(1.0 / max(n - 1, 1))

    ma = jnp.sum(za, axis=0, keepdims=True) * inv_n
    mb = jnp.sum(zb, axis=0, keepdims=True) * inv_n
    ca = za - ma
    cb = zb - mb
    inv_std_a = lax.rsqrt(jnp.sum(ca * ca, axis=0, keepdims=True) * inv_nm1)
    inv_std_b = lax.rsqrt(jnp.sum(cb * cb, axis=0, keepdims=True) * inv_nm1)

    an_ref[...] = (ca * (inv_std_a * inv_n)).astype(jnp.bfloat16)  # 1/N folded in
    bn_ref[...] = (cb * inv_std_b).astype(jnp.bfloat16)


def _loss_kernel(an_ref, bn_ref, out_ref, *, lambda_param):
    i = pl.program_id(0)
    j = pl.program_id(1)
    lam = jnp.float32(lambda_param)

    # Per-i output block is resident across the whole j sweep: init at j == 0.
    @pl.when(j == 0)
    def _init():
        out_ref[...] = jnp.zeros_like(out_ref)

    # bf16 in HBM/VMEM (bandwidth), f32 into the dot (interpret-safe; f32 MXU).
    a = an_ref[...].astype(jnp.float32)  # (N, td_i), 1/N already folded in
    b = bn_ref[...].astype(jnp.float32)  # (N, td_j)

    # One (td_i, td_j) tile of c = za_n^T @ zb_n / N, contracting the batch axis
    # of both operands directly (no transpose scratch).
    c = lax.dot_general(a, b, (((0,), (0,)), ((), ())),
                        preferred_element_type=jnp.float32)

    # Lane-dense single-position accumulation target inside the (1,8,128) block.
    onehot = jnp.logical_and(
        lax.broadcasted_iota(jnp.int32, (8, 128), 0) == 0,
        lax.broadcasted_iota(jnp.int32, (8, 128), 1) == 0)

    # Off-diagonal handled algebraically over the whole tile: lambda * sum(c^2).
    s = lam * jnp.sum(c * c)
    out_ref[...] += jnp.where(onehot, s, 0.0)[None]

    # Diagonal correction only on diagonal tiles; diag(c) is extracted from the
    # computed tile itself so the lambda*c_kk^2 terms cancel exactly.
    @pl.when(i == j)
    def _diag():
        rr = lax.broadcasted_iota(jnp.int32, c.shape, 0)
        cc = lax.broadcasted_iota(jnp.int32, c.shape, 1)
        d = jnp.sum(jnp.where(rr == cc, c, 0.0), axis=0, keepdims=True)  # (1, td)
        t = jnp.sum((d - 1.0) ** 2 - lam * d * d)
        out_ref[...] += jnp.where(onehot, t, 0.0)[None]


def make_barlow_twins_loss(lambda_param: float = 0.005):
    """Returns fn(z_a, z_b) -> scalar loss matching the PyTorch module."""

    @jax.jit
    def fn(z_a, z_b):
        n, d = z_a.shape
        vmem_limit = _vmem_limit_bytes()
        td = _pick_tile(n, d, vmem_limit)
        gi = d // td

        # ---- Stage 1: column stats + pre-normalized bf16 copies -------------
        norm_shape = jax.ShapeDtypeStruct((n, d), jnp.bfloat16)
        col_spec = pl.BlockSpec((n, td), lambda i: (0, i))
        za_n, zb_n = pl.pallas_call(
            _normalize_kernel,
            out_shape=[norm_shape, norm_shape],
            grid_spec=pltpu.PrefetchScalarGridSpec(
                num_scalar_prefetch=0,
                grid=(gi,),
                in_specs=[pl.BlockSpec((n, td), lambda i: (0, i)),
                          pl.BlockSpec((n, td), lambda i: (0, i))],
                out_specs=[col_spec, col_spec],
            ),
            compiler_params=pltpu.CompilerParams(
                dimension_semantics=("parallel",),
                vmem_limit_bytes=vmem_limit,
            ),
        )(z_a, z_b)

        # ---- Stage 2: tiled c accumulation -> per-i partial sums ------------
        kernel = functools.partial(_loss_kernel, lambda_param=lambda_param)
        partials = pl.pallas_call(
            kernel,
            out_shape=jax.ShapeDtypeStruct((gi, 8, 128), jnp.float32),
            grid_spec=pltpu.PrefetchScalarGridSpec(
                num_scalar_prefetch=0,
                grid=(gi, gi),
                in_specs=[
                    pl.BlockSpec((n, td), lambda i, j: (0, i)),  # za_n, resident over j
                    pl.BlockSpec((n, td), lambda i, j: (0, j)),  # zb_n, streamed per j
                ],
                out_specs=pl.BlockSpec((1, 8, 128), lambda i, j: (i, 0, 0)),
            ),
            compiler_params=pltpu.CompilerParams(
                # i is independent (per-i output blocks) -> sharded across TCs
                # on v7x megacore; j is the accumulation sweep.
                dimension_semantics=("parallel", "arbitrary"),
                vmem_limit_bytes=vmem_limit,
            ),
        )(za_n, zb_n)

        return jnp.sum(partials)

    return fn


def barlow_twins_loss_ref(z_a, z_b, lambda_param=0.005):
    """Pure-JAX reference mirroring the PyTorch forward."""
    n, d = z_a.shape
    za_n = (z_a - z_a.mean(0)) / z_a.std(0, ddof=1)
    zb_n = (z_b - z_b.mean(0)) / z_b.std(0, ddof=1)
    c = (za_n.T @ zb_n) / n
    eye = jnp.eye(d, dtype=z_a.dtype)
    c_diff = (c - eye) ** 2
    c_diff = jnp.where(eye > 0, c_diff, c_diff * lambda_param)
    return c_diff.sum()


if __name__ == "__main__":
    key = jax.random.PRNGKey(0)
    ka, kb = jax.random.split(key)
    N, D = 8, 32  # small (batch, embedding) consistent with the module
    z_a = jax.random.normal(ka, (N, D), dtype=jnp.float32)
    z_b = jax.random.normal(kb, (N, D), dtype=jnp.float32)

    loss_fn = make_barlow_twins_loss(lambda_param=0.005)
    loss = jax.block_until_ready(loss_fn(z_a, z_b))

    ref = jax.block_until_ready(barlow_twins_loss_ref(z_a, z_b, 0.005))
    # bf16-stored operands (f32 accumulation) -> slightly looser tolerance.
    assert jnp.allclose(loss, ref, rtol=2e-2, atol=1e-2), (loss, ref)

    print("KERNEL_OK")
</pallas_src>

<mosaic_0001>
module attributes {stable_mosaic.version = 11 : i64} {
  func.func @_normalize_kernel(%arg0: i32, %arg1: memref<8x32xf32, #tpu.memory_space<vmem>>, %arg2: memref<8x32xf32, #tpu.memory_space<vmem>>, %arg3: memref<8x32xbf16, #tpu.memory_space<vmem>>, %arg4: memref<8x32xbf16, #tpu.memory_space<vmem>>) attributes {dimension_semantics = [#tpu.dimension_semantics<parallel>], iteration_bounds = array<i64: 1>, scalar_prefetch = 0 : i64, scratch_operands = 0 : i64, tpu.core_type = #tpu.core_type<tc>, window_params = [{transform_indices = @transform_0, window_bounds = array<i64: 8, 32>}, {transform_indices = @transform_1, window_bounds = array<i64: 8, 32>}, {transform_indices = @transform_2, window_bounds = array<i64: 8, 32>}, {transform_indices = @transform_3, window_bounds = array<i64: 8, 32>}]} {
    %c0 = arith.constant 0 : index
    %c0_0 = arith.constant 0 : index
    %0 = vector.load %arg1[%c0, %c0_0] : memref<8x32xf32, #tpu.memory_space<vmem>>, vector<8x32xf32>
    %c0_1 = arith.constant 0 : index
    %c0_2 = arith.constant 0 : index
    %1 = vector.load %arg2[%c0_1, %c0_2] : memref<8x32xf32, #tpu.memory_space<vmem>>, vector<8x32xf32>
    %cst = arith.constant dense<0.000000e+00> : vector<32xf32>
    %2 = vector.multi_reduction <add>, %0, %cst [0] : vector<8x32xf32> to vector<32xf32>
    %3 = vector.shape_cast %2 : vector<32xf32> to vector<1x32xf32>
    %cst_3 = arith.constant 1.250000e-01 : f32
    %4 = vector.broadcast %cst_3 : f32 to vector<1x32xf32>
    %5 = arith.mulf %3, %4 : vector<1x32xf32>
    %cst_4 = arith.constant dense<0.000000e+00> : vector<32xf32>
    %6 = vector.multi_reduction <add>, %1, %cst_4 [0] : vector<8x32xf32> to vector<32xf32>
    %7 = vector.shape_cast %6 : vector<32xf32> to vector<1x32xf32>
    %cst_5 = arith.constant 1.250000e-01 : f32
    %8 = vector.broadcast %cst_5 : f32 to vector<1x32xf32>
    %9 = arith.mulf %7, %8 : vector<1x32xf32>
    %10 = vector.broadcast %5 : vector<1x32xf32> to vector<8x32xf32>
    %11 = arith.subf %0, %10 : vector<8x32xf32>
    %12 = vector.broadcast %9 : vector<1x32xf32> to vector<8x32xf32>
    %13 = arith.subf %1, %12 : vector<8x32xf32>
    %14 = arith.mulf %11, %11 : vector<8x32xf32>
    %cst_6 = arith.constant dense<0.000000e+00> : vector<32xf32>
    %15 = vector.multi_reduction <add>, %14, %cst_6 [0] : vector<8x32xf32> to vector<32xf32>
    %16 = vector.shape_cast %15 : vector<32xf32> to vector<1x32xf32>
    %cst_7 = arith.constant 0.142857149 : f32
    %17 = vector.broadcast %cst_7 : f32 to vector<1x32xf32>
    %18 = arith.mulf %16, %17 : vector<1x32xf32>
    %19 = math.rsqrt %18 : vector<1x32xf32>
    %20 = arith.mulf %13, %13 : vector<8x32xf32>
    %cst_8 = arith.constant dense<0.000000e+00> : vector<32xf32>
    %21 = vector.multi_reduction <add>, %20, %cst_8 [0] : vector<8x32xf32> to vector<32xf32>
    %22 = vector.shape_cast %21 : vector<32xf32> to vector<1x32xf32>
    %cst_9 = arith.constant 0.142857149 : f32
    %23 = vector.broadcast %cst_9 : f32 to vector<1x32xf32>
    %24 = arith.mulf %22, %23 : vector<1x32xf32>
    %25 = math.rsqrt %24 : vector<1x32xf32>
    %cst_10 = arith.constant 1.250000e-01 : f32
    %26 = vector.broadcast %cst_10 : f32 to vector<1x32xf32>
    %27 = arith.mulf %19, %26 : vector<1x32xf32>
    %28 = vector.broadcast %27 : vector<1x32xf32> to vector<8x32xf32>
    %29 = arith.mulf %11, %28 : vector<8x32xf32>
    %30 = arith.truncf %29 : vector<8x32xf32> to vector<8x32xbf16>
    %c0_11 = arith.constant 0 : index
    %c0_12 = arith.constant 0 : index
    %31 = vector.load %arg3[%c0_11, %c0_12] : memref<8x32xbf16, #tpu.memory_space<vmem>>, vector<8x32xbf16>
    tpu.vector_store %arg3[%c0_11, %c0_12], %30 {strides = array<i32>} : memref<8x32xbf16, #tpu.memory_space<vmem>>, vector<8x32xbf16>,
    %32 = vector.broadcast %25 : vector<1x32xf32> to vector<8x32xf32>
    %33 = arith.mulf %13, %32 : vector<8x32xf32>
    %34 = arith.truncf %33 : vector<8x32xf32> to vector<8x32xbf16>
    %c0_13 = arith.constant 0 : index
    %c0_14 = arith.constant 0 : index
    %35 = vector.load %arg4[%c0_13, %c0_14] : memref<8x32xbf16, #tpu.memory_space<vmem>>, vector<8x32xbf16>
    tpu.vector_store %arg4[%c0_13, %c0_14], %34 {strides = array<i32>} : memref<8x32xbf16, #tpu.memory_space<vmem>>, vector<8x32xbf16>,
    return
  }
  func.func @transform_0(%arg0: i32) -> (i32, i32) {
    %c0_i32 = arith.constant 0 : i32
    %c0_i32_0 = arith.constant 0 : i32
    return %c0_i32, %arg0 : i32, i32
  }
  func.func @transform_1(%arg0: i32) -> (i32, i32) {
    %c0_i32 = arith.constant 0 : i32
    %c0_i32_0 = arith.constant 0 : i32
    return %c0_i32, %arg0 : i32, i32
  }
  func.func @transform_2(%arg0: i32) -> (i32, i32) {
    %c0_i32 = arith.constant 0 : i32
    %c0_i32_0 = arith.constant 0 : i32
    return %c0_i32, %arg0 : i32, i32
  }
  func.func @transform_3(%arg0: i32) -> (i32, i32) {
    %c0_i32 = arith.constant 0 : i32
    %c0_i32_0 = arith.constant 0 : i32
    return %c0_i32, %arg0 : i32, i32
  }
}

module attributes {stable_mosaic.version = 11 : i64} {
  func.func @_loss_kernel(%arg0: i32, %arg1: i32, %arg2: memref<8x32xbf16, #tpu.memory_space<vmem>>, %arg3: memref<8x32xbf16, #tpu.memory_space<vmem>>, %arg4: memref<1x8x128xf32, #tpu.memory_space<vmem>>) attributes {dimension_semantics = [#tpu.dimension_semantics<parallel>, #tpu.dimension_semantics<arbitrary>], iteration_bounds = array<i64: 1, 1>, scalar_prefetch = 0 : i64, scratch_operands = 0 : i64, tpu.core_type = #tpu.core_type<tc>, window_params = [{transform_indices = @transform_0, window_bounds = array<i64: 8, 32>}, {transform_indices = @transform_1, window_bounds = array<i64: 8, 32>}, {transform_indices = @transform_2, window_bounds = array<i64: 1, 8, 128>}]} {
    %c0_i32 = arith.constant 0 : i32
    %0 = arith.cmpi eq, %arg1, %c0_i32 : i32
    %1 = arith.extui %0 : i1 to i32
    %c0_i32_0 = arith.constant 0 : i32
    %2 = arith.cmpi ne, %1, %c0_i32_0 : i32
    scf.if %2 {
      %cst_17 = arith.constant 0.000000e+00 : f32
      %31 = vector.broadcast %cst_17 : f32 to vector<1x8x128xf32>
      %c0_18 = arith.constant 0 : index
      %c0_19 = arith.constant 0 : index
      %c0_20 = arith.constant 0 : index
      %32 = vector.load %arg4[%c0_18, %c0_19, %c0_20] : memref<1x8x128xf32, #tpu.memory_space<vmem>>, vector<1x8x128xf32>
      tpu.vector_store %arg4[%c0_18, %c0_19, %c0_20], %31 {strides = array<i32>} : memref<1x8x128xf32, #tpu.memory_space<vmem>>, vector<1x8x128xf32>,
    } else {
    }
    %c0 = arith.constant 0 : index
    %c0_1 = arith.constant 0 : index
    %3 = vector.load %arg2[%c0, %c0_1] : memref<8x32xbf16, #tpu.memory_space<vmem>>, vector<8x32xbf16>
    %4 = arith.extf %3 : vector<8x32xbf16> to vector<8x32xf32>
    %c0_2 = arith.constant 0 : index
    %c0_3 = arith.constant 0 : index
    %5 = vector.load %arg3[%c0_2, %c0_3] : memref<8x32xbf16, #tpu.memory_space<vmem>>, vector<8x32xbf16>
    %6 = arith.extf %5 : vector<8x32xbf16> to vector<8x32xf32>
    %cst = arith.constant dense<0.000000e+00> : vector<32x32xf32>
    %7 = tpu.matmul %4, %6, %cst {dimension_numbers = #tpu.dot_dimension_numbers<[0], [0], [1], [1], [0, 1, 1, 1], [], []>} : vector<8x32xf32>, vector<8x32xf32>, vector<32x32xf32> -> vector<32x32xf32>
    %8 = tpu.iota {dimensions = array<i32: 0>} : vector<8x128xi32>
    %c0_i32_4 = arith.constant 0 : i32
    %9 = vector.broadcast %c0_i32_4 : i32 to vector<8x128xi32>
    %10 = arith.cmpi eq, %8, %9 : vector<8x128xi32>
    %11 = tpu.iota {dimensions = array<i32: 1>} : vector<8x128xi32>
    %c0_i32_5 = arith.constant 0 : i32
    %12 = vector.broadcast %c0_i32_5 : i32 to vector<8x128xi32>
    %13 = arith.cmpi eq, %11, %12 : vector<8x128xi32>
    %14 = arith.andi %10, %13 : vector<8x128xi1>
    %15 = arith.mulf %7, %7 : vector<32x32xf32>
    %16 = vector.shape_cast %15 : vector<32x32xf32> to vector<1x32x32xf32>
    %cst_6 = arith.constant dense<0.000000e+00> : vector<1xf32>
    %17 = vector.multi_reduction <add>, %16, %cst_6 [1, 2] : vector<1x32x32xf32> to vector<1xf32>
    %18 = vector.shape_cast %17 : vector<1xf32> to vector<1x1x1xf32>
    %19 = vector.extract %18[0, 0, 0] : f32 from vector<1x1x1xf32>
    %cst_7 = arith.constant 5.000000e-03 : f32
    %20 = arith.mulf %cst_7, %19 : f32
    %c0_8 = arith.constant 0 : index
    %c0_9 = arith.constant 0 : index
    %c0_10 = arith.constant 0 : index
    %21 = vector.load %arg4[%c0_8, %c0_9, %c0_10] : memref<1x8x128xf32, #tpu.memory_space<vmem>>, vector<1x8x128xf32>
    %cst_11 = arith.constant 0.000000e+00 : f32
    %22 = vector.broadcast %20 : f32 to vector<8x128xf32>
    %23 = vector.broadcast %cst_11 : f32 to vector<8x128xf32>
    %24 = arith.select %14, %22, %23 : vector<8x128xi1>, vector<8x128xf32>
    %25 = vector.shape_cast %24 : vector<8x128xf32> to vector<1x8x128xf32>
    %26 = arith.addf %21, %25 : vector<1x8x128xf32>
    %c0_12 = arith.constant 0 : index
    %c0_13 = arith.constant 0 : index
    %c0_14 = arith.constant 0 : index
    %27 = vector.load %arg4[%c0_12, %c0_13, %c0_14] : memref<1x8x128xf32, #tpu.memory_space<vmem>>, vector<1x8x128xf32>
    tpu.vector_store %arg4[%c0_12, %c0_13, %c0_14], %26 {strides = array<i32>} : memref<1x8x128xf32, #tpu.memory_space<vmem>>, vector<1x8x128xf32>,
    %28 = arith.cmpi eq, %arg0, %arg1 : i32
    %29 = arith.extui %28 : i1 to i32
    %cst_15 = arith.constant 5.000000e-03 : f32
    %c0_i32_16 = arith.constant 0 : i32
    %30 = arith.cmpi ne, %29, %c0_i32_16 : i32
    scf.if %30 {
      %31 = tpu.iota {dimensions = array<i32: 0>} : vector<32x32xi32>
      %32 = tpu.iota {dimensions = array<i32: 1>} : vector<32x32xi32>
      %33 = arith.cmpi eq, %31, %32 : vector<32x32xi32>
      %cst_17 = arith.constant 0.000000e+00 : f32
      %34 = vector.broadcast %cst_17 : f32 to vector<32x32xf32>
      %35 = arith.select %33, %7, %34 : vector<32x32xi1>, vector<32x32xf32>
      %cst_18 = arith.constant dense<0.000000e+00> : vector<32xf32>
      %36 = vector.multi_reduction <add>, %35, %cst_18 [0] : vector<32x32xf32> to vector<32xf32>
      %37 = vector.shape_cast %36 : vector<32xf32> to vector<1x32xf32>
      %cst_19 = arith.constant 1.000000e+00 : f32
      %38 = vector.broadcast %cst_19 : f32 to vector<1x32xf32>
      %39 = arith.subf %37, %38 : vector<1x32xf32>
      %40 = arith.mulf %39, %39 : vector<1x32xf32>
      %41 = vector.broadcast %cst_15 : f32 to vector<1x32xf32>
      %42 = arith.mulf %41, %37 : vector<1x32xf32>
      %43 = arith.mulf %42, %37 : vector<1x32xf32>
      %44 = arith.subf %40, %43 : vector<1x32xf32>
      %45 = vector.shape_cast %44 : vector<1x32xf32> to vector<1x1x32xf32>
      %cst_20 = arith.constant dense<0.000000e+00> : vector<1xf32>
      %46 = vector.multi_reduction <add>, %45, %cst_20 [1, 2] : vector<1x1x32xf32> to vector<1xf32>
      %47 = vector.shape_cast %46 : vector<1xf32> to vector<1x1x1xf32>
      %48 = vector.extract %47[0, 0, 0] : f32 from vector<1x1x1xf32>
      %c0_21 = arith.constant 0 : index
      %c0_22 = arith.constant 0 : index
      %c0_23 = arith.constant 0 : index
      %49 = vector.load %arg4[%c0_21, %c0_22, %c0_23] : memref<1x8x128xf32, #tpu.memory_space<vmem>>, vector<1x8x128xf32>
      %cst_24 = arith.constant 0.000000e+00 : f32
      %50 = vector.broadcast %48 : f32 to vector<8x128xf32>
      %51 = vector.broadcast %cst_24 : f32 to vector<8x128xf32>
      %52 = arith.select %14, %50, %51 : vector<8x128xi1>, vector<8x128xf32>
      %53 = vector.shape_cast %52 : vector<8x128xf32> to vector<1x8x128xf32>
      %54 = arith.addf %49, %53 : vector<1x8x128xf32>
      %c0_25 = arith.constant 0 : index
      %c0_26 = arith.constant 0 : index
      %c0_27 = arith.constant 0 : index
      %55 = vector.load %arg4[%c0_25, %c0_26, %c0_27] : memref<1x8x128xf32, #tpu.memory_space<vmem>>, vector<1x8x128xf32>
      tpu.vector_store %arg4[%c0_25, %c0_26, %c0_27], %54 {strides = array<i32>} : memref<1x8x128xf32, #tpu.memory_space<vmem>>, vector<1x8x128xf32>,
    } else {
    }
    return
  }
  func.func @transform_0(%arg0: i32, %arg1: i32) -> (i32, i32) {
    %c0_i32 = arith.constant 0 : i32
    %c0_i32_0 = arith.constant 0 : i32
    return %c0_i32, %arg0 : i32, i32
  }
  func.func @transform_1(%arg0: i32, %arg1: i32) -> (i32, i32) {
    %c0_i32 = arith.constant 0 : i32
    %c0_i32_0 = arith.constant 0 : i32
    return %c0_i32, %arg1 : i32, i32
  }
  func.func @transform_2(%arg0: i32, %arg1: i32) -> (i32, i32, i32) {
    %c0_i32 = arith.constant 0 : i32
    %c0_i32_0 = arith.constant 0 : i32
    %c0_i32_1 = arith.constant 0 : i32
    return %arg0, %c0_i32, %c0_i32_0 : i32, i32, i32
  }
}

</mosaic_0001>

<llo_original>
// kernel: fn.2
$region0: #{fn.2}
  #allocation0 [shape = 'u32[]', space=smem, size = 0x4, offset = 0x4, fixed_abs, tag = 'smem constant byte address 0x4 - core index']
  #allocation1 [shape = 'u32[144,128]{1,0:T(1,128)}', space=vmem, size = 0x12000, scoped, tag = 'internal scratch']
  %s0 = inlined_call_operand.hbm [shape: f32[8,32], index: 0, kind: input, shape index: {}]
  %s1 = inlined_call_operand.hbm [shape: f32[8,32], index: 1, kind: input, shape index: {}]
  %s2 = inlined_call_operand.vmem [shape: bf16[8,32], index: 2, kind: output, shape index: {0}]
  %s3 = inlined_call_operand.vmem [shape: bf16[8,32], index: 3, kind: output, shape index: {1}]
  %4 = xla_tuple %s2, %s3
  %s5 = sld [smem:[#allocation0]]
  $region34: #{fn.2} parent=0
    _
  %s7 = ssub.s32 1, %s5
  %s8 = scalar_select 0, %s7, %s5
  $region1: #{fn.2} parent=0
    #allocation2 [shape = 'u8[4096]{0}', space=vmem, size = 0x1000, scoped, tag = 'input window, operand 0, single buffered']
    #allocation3 [shape = 's32[1]{0}', space=sflag, size = 0x4, scoped, tag = 'scoped memory for fn.2']
    #allocation4 [shape = 'u8[4096]{0}', space=vmem, size = 0x1000, scoped, tag = 'input window, operand 1, single buffered']
    #allocation5 [shape = 's32[1]{0}', space=sflag, size = 0x4, scoped, tag = 'scoped memory for fn.2']
    %9 = vsyncpa [#allocation3], 0
    %10 = vsyncpa [#allocation5], 0
    // Predicated region
    $region2: #{fn.2} parent=1 // pred_check
      _
    $region3: #{fn.2} parent=1 // pred_check_branch
      %12 = sbr.rel (0) target = $region5
    $region4: #{fn.2} parent=1 // pred_region
      %s14 = ssub.s32 128, 128
      %15 = vsyncadd [#allocation3], %s14
      %s17 = sshll.u32 [#allocation2], 4
      %s18 = int_to_ptr.vmem [resolvable:$true] %s17
      %20 = dma.hbm_to_vmem [thread:$0]  %s0, 128, %s18, [#allocation3]
    $region5: #{fn.2} parent=1 // pred_fallthru
      _
    // Predicated region
    $region6: #{fn.2} parent=1 // pred_check
      _
    $region7: #{fn.2} parent=1 // pred_check_branch
      %22 = sbr.rel (0) target = $region9
    $region8: #{fn.2} parent=1 // pred_region
      %s24 = ssub.s32 128, 128
      %25 = vsyncadd [#allocation5], %s24
      %s27 = sshll.u32 [#allocation4], 4
      %s28 = int_to_ptr.vmem [resolvable:$true] %s27
      %30 = dma.hbm_to_vmem [thread:$0]  %s1, 128, %s28, [#allocation5]
    $region9: #{fn.2} parent=1 // pred_fallthru
      _
    // Predicated region
    $region10: #{fn.2} parent=1 // pred_check
      _
    $region11: #{fn.2} parent=1 // pred_check_branch
      %32 = sbr.rel (0) target = $region13
    $region12: #{fn.2} parent=1 // pred_region
      %33 = dma.done [#allocation3], 128
    $region13: #{fn.2} parent=1 // pred_fallthru
      _
    // Predicated region
    $region14: #{fn.2} parent=1 // pred_check
      _
    $region15: #{fn.2} parent=1 // pred_check_branch
      %35 = sbr.rel (0) target = $region17
    $region16: #{fn.2} parent=1 // pred_region
      %36 = dma.done [#allocation5], 128
    $region17: #{fn.2} parent=1 // pred_fallthru
      _
    %v37 = vld [vmem:[#allocation2] sm:$0xff]
    %v38 = vld [vmem:[#allocation4] sm:$0xff]
    %vm39 = vcmask 261120
    %v40 = vsel %vm39, %v37, 0.0
    %v41 = vrot.slane %v40, 4
    %v42 = vadd.f32 %v40, %v41
    %v43 = vrot.slane %v42, 2
    %v44 = vadd.f32 %v42, %v43
    %v45 = vrot.slane %v44, 1
    %v46 = vadd.f32 %v44, %v45
    %v47 = vmul.f32 %v46, 0.125
    %v48 = vsel %vm39, %v38, 0.0
    %v49 = vrot.slane %v48, 4
    %v50 = vadd.f32 %v48, %v49
    %v51 = vrot.slane %v50, 2
    %v52 = vadd.f32 %v50, %v51
    %v53 = vrot.slane %v52, 1
    %v54 = vadd.f32 %v52, %v53
    %v55 = vmul.f32 %v54, 0.125
    %v56 = vsub.f32 %v37, %v47
    %v57 = vsub.f32 %v38, %v55
    %v58 = vmul.f32 %v56, %v56
    %v59 = vsel %vm39, %v58, 0.0
    %v60 = vrot.slane %v59, 4
    %v61 = vadd.f32 %v59, %v60
    %v62 = vrot.slane %v61, 2
    %v63 = vadd.f32 %v61, %v62
    %v64 = vrot.slane %v63, 1
    %v65 = vadd.f32 %v63, %v64
    %v66 = vmul.f32 %v65, 0.14285715
    %v67 = vrsqrt.pop %v66
    %v68 = vmul.f32 %v57, %v57
    %v69 = vsel %vm39, %v68, 0.0
    %v70 = vrot.slane %v69, 4
    %v71 = vadd.f32 %v69, %v70
    %v72 = vrot.slane %v71, 2
    %v73 = vadd.f32 %v71, %v72
    %v74 = vrot.slane %v73, 1
    %v75 = vadd.f32 %v73, %v74
    %v76 = vmul.f32 %v75, 0.14285715
    %v77 = vrsqrt.pop %v76
    %v78 = vmul.f32 %v67, 0.125
    %v79 = vmul.f32 %v56, %v78
    %v80 = vpack.c.bf16 %v79, %v79
    %vm81 = vcmask 257024
    %82 = vst.msk [vmem:[%s2] sm:$0xf] %vm81, %v80
    %v83 = vmul.f32 %v57, %v77
    %v84 = vpack.c.bf16 %v83, %v83
    %85 = vst.msk [vmem:[%s3] sm:$0xf] %vm81, %v84
    // Predicated region
    $region18: #{fn.2} parent=1 // pred_check
      _
    $region19: #{fn.2} parent=1 // pred_check_branch
      %87 = sbr.rel (0) target = $region21
    $region20: #{fn.2} parent=1 // pred_region
      _
    $region21: #{fn.2} parent=1 // pred_fallthru
      _
    // Predicated region
    $region22: #{fn.2} parent=1 // pred_check
      _
    $region23: #{fn.2} parent=1 // pred_check_branch
      %89 = sbr.rel (0) target = $region25
    $region24: #{fn.2} parent=1 // pred_region
      _
    $region25: #{fn.2} parent=1 // pred_fallthru
      _
    // Predicated region
    $region26: #{fn.2} parent=1 // pred_check
      _
    $region27: #{fn.2} parent=1 // pred_check_branch
      %91 = sbr.rel (0) target = $region29
    $region28: #{fn.2} parent=1 // pred_region
      _
    $region29: #{fn.2} parent=1 // pred_fallthru
      _
    // Predicated region
    $region30: #{fn.2} parent=1 // pred_check
      _
    $region31: #{fn.2} parent=1 // pred_check_branch
      %93 = sbr.rel (0) target = $region33
    $region32: #{fn.2} parent=1 // pred_region
      _
    $region33: #{fn.2} parent=1 // pred_fallthru
      _
    %94 = vsyncpa [#allocation3], 1
    %95 = vsyncpa [#allocation5], 1

// kernel: fn.3
$region0: #{fn.3}
  #allocation0 [shape = 'u32[]', space=smem, size = 0x4, offset = 0x4, fixed_abs, tag = 'smem constant byte address 0x4 - core index']
  #allocation1 [shape = 'u32[144,128]{1,0:T(1,128)}', space=vmem, size = 0x12000, scoped, tag = 'internal scratch']
  %s0 = inlined_call_operand.vmem [shape: bf16[8,32], index: 0, kind: input, shape index: {}]
  %s1 = inlined_call_operand.vmem [shape: bf16[8,32], index: 1, kind: input, shape index: {}]
  %s2 = inlined_call_operand.vmem [shape: f32[1,8,128], index: 2, kind: output, shape index: {}]
  %s3 = sld [smem:[#allocation0]]
  $region26: #{fn.3} parent=0
    _
  %s5 = ssub.s32 1, %s3
  %s6 = scalar_select 0, %s5, %s3
  // Predicated region
  $region2: #{fn.3} parent=0 // pred_check
    _
  $region3: #{fn.3} parent=0 // pred_check_branch
    %8 = sbr.rel (0) target = $region5
  $region4: #{fn.3} parent=0 // pred_region
    _
  $region5: #{fn.3} parent=0 // pred_fallthru
    _
  // Predicated region
  $region6: #{fn.3} parent=0 // pred_check
    _
  $region7: #{fn.3} parent=0 // pred_check_branch
    %10 = sbr.rel (0) target = $region9
  $region8: #{fn.3} parent=0 // pred_region
    _
  $region9: #{fn.3} parent=0 // pred_fallthru
    _
  %p11 = scmp.eq.s32.totalorder 0, 0
  // Predicated region
  $region10: #{fn.3} parent=0 // pred_check
    %p12 = pneg %p11
  $region11: #{fn.3} parent=0 // pred_check_branch
    %14 = sbr.rel (%p12) target = $region13
  $region12: #{fn.3} parent=0 // pred_region
    %15 = vst [vmem:[%s2] sm:$0xff] 0.0
  $region13: #{fn.3} parent=0 // pred_fallthru
    _
  %v16 = vld [vmem:[%s0] sm:$0xf]
  %v17 = vunpack.c.l.bf16 %v16
  %v18 = vld [vmem:[%s1] sm:$0xf]
  %v19 = vunpack.c.l.bf16 %v18
  %20 = vxpose.xlu0.b32.start [1/16] %v17, 128
  %21 = vxpose.xlu0.b32.cont [2/16] 0.0, 128
  %22 = vxpose.xlu0.b32.cont [3/16] 0.0, 128
  %23 = vxpose.xlu0.b32.cont [4/16] 0.0, 128
  %24 = vxpose.xlu0.b32.cont [5/16] 0.0, 128
  %25 = vxpose.xlu0.b32.cont [6/16] 0.0, 128
  %26 = vxpose.xlu0.b32.cont [7/16] 0.0, 128
  %27 = vxpose.xlu0.b32.cont [8/16] 0.0, 128
  %28 = vxpose.xlu0.b32.cont [9/16] 0.0, 128
  %29 = vxpose.xlu0.b32.cont [10/16] 0.0, 128
  %30 = vxpose.xlu0.b32.cont [11/16] 0.0, 128
  %31 = vxpose.xlu0.b32.cont [12/16] 0.0, 128
  %32 = vxpose.xlu0.b32.cont [13/16] 0.0, 128
  %33 = vxpose.xlu0.b32.cont [14/16] 0.0, 128
  %34 = vxpose.xlu0.b32.cont [15/16] 0.0, 128
  %35 = vxpose.xlu0.b32.end [16/16] 0.0, 128
  %v36 = vpop.trf.xlu0
  %v37 = vpop.trf.xlu0
  %v38 = vpop.trf.xlu0
  %v39 = vpop.trf.xlu0
  %v40 = vpop.trf.xlu0
  %v41 = vpop.trf.xlu0
  %v42 = vpop.trf.xlu0
  %v43 = vpop.trf.xlu0
  %v44 = vpop.trf.xlu0
  %v45 = vpop.trf.xlu0
  %v46 = vpop.trf.xlu0
  %v47 = vpop.trf.xlu0
  %v48 = vpop.trf.xlu0
  %v49 = vpop.trf.xlu0
  %v50 = vpop.trf.xlu0
  %v51 = vpop.trf.xlu0
  %vm52 = vcmask 64512
  %v54 = vsel %vm52, %v36, 0
  %v57 = vsel %vm52, %v37, 0
  %v60 = vsel %vm52, %v38, 0
  %v63 = vsel %vm52, %v39, 0
  %65 = vmatprep.subr.mxu0 0.0
  %66 = vmatpush1.msra.mxu0 0.0
  %67 = vmatprep.subr.mxu0 0.0
  %68 = vmatpush1.msra.mxu0 0.0
  %69 = vmatprep.subr.mxu0 0.0
  %70 = vmatpush1.msra.mxu0 0.0
  %71 = vmatprep.subr.mxu0 0.0
  %72 = vmatpush1.msra.mxu0 0.0
  %73 = vmatprep.subr.mxu0 0.0
  %74 = vmatpush1.msra.mxu0 0.0
  %75 = vmatprep.subr.mxu0 0.0
  %76 = vmatpush1.msra.mxu0 0.0
  %77 = vmatprep.subr.mxu0 0.0
  %78 = vmatpush1.msra.mxu0 0.0
  %79 = vmatprep.subr.mxu0 0.0
  %80 = vmatpush1.msra.mxu0 0.0
  %81 = vmatprep.subr.mxu0 0.0
  %82 = vmatpush1.msra.mxu0 0.0
  %83 = vmatprep.subr.mxu0 0.0
  %84 = vmatpush1.msra.mxu0 0.0
  %85 = vmatprep.subr.mxu0 0.0
  %86 = vmatpush1.msra.mxu0 0.0
  %87 = vmatprep.subr.mxu0 0.0
  %88 = vmatpush1.msra.mxu0 0.0
  %89 = vmatprep.subr.mxu0 0.0
  %90 = vmatpush1.msra.mxu0 0.0
  %91 = vmatprep.subr.mxu0 0.0
  %92 = vmatpush1.msra.mxu0 0.0
  %93 = vmatprep.subr.mxu0 0.0
  %94 = vmatpush1.msra.mxu0 0.0
  %95 = vmatprep.subr.mxu0 0.0
  %96 = vmatpush1.msra.mxu0 %v19
  %97 = vmatprep.subr.mxu0 0.0
  %98 = vmatpush2.msra.mxu0 0.0
  %99 = vmatprep.subr.mxu0 0.0
  %100 = vmatpush2.msra.mxu0 0.0
  %101 = vmatprep.subr.mxu0 0.0
  %102 = vmatpush2.msra.mxu0 0.0
  %103 = vmatprep.subr.mxu0 0.0
  %104 = vmatpush2.msra.mxu0 0.0
  %105 = vmatprep.subr.mxu0 0.0
  %106 = vmatpush2.msra.mxu0 0.0
  %107 = vmatprep.subr.mxu0 0.0
  %108 = vmatpush2.msra.mxu0 0.0
  %109 = vmatprep.subr.mxu0 0.0
  %110 = vmatpush2.msra.mxu0 0.0
  %111 = vmatprep.subr.mxu0 0.0
  %112 = vmatpush2.msra.mxu0 0.0
  %113 = vmatprep.subr.mxu0 0.0
  %114 = vmatpush2.msra.mxu0 0.0
  %115 = vmatprep.subr.mxu0 0.0
  %116 = vmatpush2.msra.mxu0 0.0
  %117 = vmatprep.subr.mxu0 0.0
  %118 = vmatpush2.msra.mxu0 0.0
  %119 = vmatprep.subr.mxu0 0.0
  %120 = vmatpush2.msra.mxu0 0.0
  %121 = vmatprep.subr.mxu0 0.0
  %122 = vmatpush2.msra.mxu0 0.0
  %123 = vmatprep.subr.mxu0 0.0
  %124 = vmatpush2.msra.mxu0 0.0
  %125 = vmatprep.subr.mxu0 0.0
  %126 = vmatpush2.msra.mxu0 0.0
  %127 = vmatprep.subr.mxu0 0.0
  %128 = vmatpush2.msra.mxu0 0.0
  %129 = vmatprep.mubr.f32.mxu0 0.0
  %130 = vmatmul.mubr.f32.gmra.mxu0 %v54
  %v131 = vpop.f32.mrf.mxu0
  %v132 = vadd.f32 0.0, %v131
  %v133 = vpop.f32.mrf.mxu0
  %134 = vmatprep.mubr.f32.mxu0 0.0
  %135 = vmatmul.mubr.f32.gmra.mxu0 %v57
  %v136 = vpop.f32.mrf.mxu0
  %v137 = vadd.f32 0.0, %v136
  %v138 = vpop.f32.mrf.mxu0
  %139 = vmatprep.mubr.f32.mxu0 0.0
  %140 = vmatmul.mubr.f32.gmra.mxu0 %v60
  %v141 = vpop.f32.mrf.mxu0
  %v142 = vadd.f32 0.0, %v141
  %v143 = vpop.f32.mrf.mxu0
  %144 = vmatprep.mubr.f32.mxu0 0.0
  %145 = vmatmul.mubr.f32.gmra.mxu0 %v63
  %v146 = vpop.f32.mrf.mxu0
  %v147 = vadd.f32 0.0, %v146
  %v148 = vpop.f32.mrf.mxu0
  %149 = vdwg.mxu0
  %v150 = vlaneseq
  %v151 = vshrl.u32 %v150, 7
  %vm152 = vcmp.eq.s32.totalorder %v151, 0
  %v153 = vlaneseq
  %v154 = vand.u32 %v153, 127
  %vm155 = vcmp.eq.s32.totalorder %v154, 0
  %vm156 = vmand %vm152, %vm155
  %v157 = vmul.f32 %v132, %v132
  %v158 = vmul.f32 %v137, %v137
  %v159 = vmul.f32 %v142, %v142
  %v160 = vmul.f32 %v147, %v147
  %vm161 = vcmask 261120
  %v162 = vsel %vm161, %v157, 0.0
  %v163 = vsel %vm161, %v158, 0.0
  %v164 = vadd.f32 %v162, %v163
  %v165 = vsel %vm161, %v159, 0.0
  %v166 = vadd.f32 %v164, %v165
  %v167 = vsel %vm161, %v160, 0.0
  %v168 = vadd.f32 %v166, %v167
  %169 = vadd.xlane.f32.xlu0 %v168
  %v170 = vpop.xlane.xlu0 %169
  %v171 = vrot.slane %v170, 4
  %v172 = vadd.f32 %v170, %v171
  %v173 = vrot.slane %v172, 2
  %v174 = vadd.f32 %v172, %v173
  %v175 = vrot.slane %v174, 1
  %v176 = vadd.f32 %v174, %v175
  %s177 = vtos %v176
  %s178 = smul.f32 %s177, 0.005
  %v179 = vld [vmem:[%s2] sm:$0xff]
  %v180 = vstv %s178
  %v181 = vsel %vm156, %v180, 0.0
  %v182 = vadd.f32 %v179, %v181
  %183 = vst [vmem:[%s2] sm:$0xff] %v182
  %p184 = scmp.eq.s32.totalorder 0, 0
  // Predicated region
  $region14: #{fn.3} parent=0 // pred_check
    %p185 = pneg %p184
  $region15: #{fn.3} parent=0 // pred_check_branch
    %187 = sbr.rel (%p185) target = $region17
  $region16: #{fn.3} parent=0 // pred_region
    %v188 = vadd.s32 %v151, 8
    %v189 = vadd.s32 %v151, 16
    %v190 = vadd.s32 %v151, 24
    %vm191 = vcmp.eq.s32.totalorder %v151, %v154
    %vm192 = vcmp.eq.s32.totalorder %v188, %v154
    %vm193 = vcmp.eq.s32.totalorder %v189, %v154
    %vm194 = vcmp.eq.s32.totalorder %v190, %v154
    %v195 = vsel %vm191, %v132, 0.0
    %v196 = vsel %vm192, %v137, 0.0
    %v197 = vsel %vm193, %v142, 0.0
    %v198 = vsel %vm194, %v147, 0.0
    %v199 = vsel %vm161, %v195, 0.0
    %v200 = vsel %vm161, %v196, 0.0
    %v201 = vadd.f32 %v199, %v200
    %v202 = vsel %vm161, %v197, 0.0
    %v203 = vadd.f32 %v201, %v202
    %v204 = vsel %vm161, %v198, 0.0
    %v205 = vadd.f32 %v203, %v204
    %v206 = vrot.slane %v205, 4
    %v207 = vadd.f32 %v205, %v206
    %v208 = vrot.slane %v207, 2
    %v209 = vadd.f32 %v207, %v208
    %v210 = vrot.slane %v209, 1
    %v211 = vadd.f32 %v209, %v210
    %v212 = vsub.f32 %v211, 1.0
    %v213 = vmul.f32 %v212, %v212
    %v214 = vmul.f32 %v211, 0.005
    %v215 = vmul.f32 %v214, %v211
    %v216 = vsub.f32 %v213, %v215
    %vm217 = vcmask 253952
    %v218 = vsel %vm217, %v216, 0.0
    %219 = vadd.xlane.f32.xlu0 %v218
    %v220 = vpop.xlane.xlu0 %219
    %v221 = vrot.slane %v220, 4
    %v222 = vadd.f32 %v220, %v221
    %v223 = vrot.slane %v222, 2
    %v224 = vadd.f32 %v222, %v223
    %v225 = vrot.slane %v224, 1
    %v226 = vadd.f32 %v224, %v225
    %s227 = vtos %v226
    %v228 = vld [vmem:[%s2] sm:$0xff]
    %v229 = vstv %s227
    %v230 = vsel %vm156, %v229, 0.0
    %v231 = vadd.f32 %v228, %v230
    %232 = vst [vmem:[%s2] sm:$0xff] %v231
  $region17: #{fn.3} parent=0 // pred_fallthru
    _
  // Predicated region
  $region18: #{fn.3} parent=0 // pred_check
    _
  $region19: #{fn.3} parent=0 // pred_check_branch
    %234 = sbr.rel (0) target = $region21
  $region20: #{fn.3} parent=0 // pred_region
    _
  $region21: #{fn.3} parent=0 // pred_fallthru
    _
  // Predicated region
  $region22: #{fn.3} parent=0 // pred_check
    _
  $region23: #{fn.3} parent=0 // pred_check_branch
    %236 = sbr.rel (0) target = $region25
  $region24: #{fn.3} parent=0 // pred_region
    _
  $region25: #{fn.3} parent=0 // pred_fallthru
    _

</llo_original>
